<compile_context>
chip_gen: v7x
topology: tpu7x:2x2x1
jax: 0.10.0
libtpu: 0.0.40
codegen_flags: <defaults>
</compile_context>

<pallas_src>
import functools

import jax
import jax.numpy as jnp
from jax import lax
from jax.experimental import pallas as pl
from jax.experimental.pallas import tpu as pltpu


def _round_up(x: int, m: int) -> int:
    return ((x + m - 1) // m) * m


def spectral_linear_kernel(inv_sigma_ref, x_ref, w_ref, b_ref, o_ref, acc_ref):
    # inv_sigma_ref: (1,) f32 in SMEM (scalar prefetch)
    # x_ref: (tm, tk) VMEM     w_ref: (tn, tk) VMEM     b_ref: (1, tn) VMEM
    # o_ref: (tm, tn) VMEM     acc_ref: (tm, tn) f32 VMEM scratch
    k = pl.program_id(2)

    @pl.when(k == 0)
    def _():
        acc_ref[...] = jnp.zeros_like(acc_ref)

    # Contract last dim of x (IN) against last dim of w (IN): native MXU
    # matmul, no transpose / relayout of the weight tile.
    acc_ref[...] += lax.dot_general(
        x_ref[...], w_ref[...],
        dimension_numbers=(((1,), (1,)), ((), ())),
        preferred_element_type=jnp.float32)

    @pl.when(k == pl.num_programs(2) - 1)
    def _():
        # Deferred spectral scale fused with the bias add (tm*tn VPU ops only).
        o_ref[...] = (acc_ref[...] * inv_sigma_ref[0]
                      + b_ref[...]).astype(o_ref.dtype)


def top_singular_value(w, iters: int = 100):
    """Power iteration for the largest singular value of w (OUT, IN)."""
    out_f, in_f = w.shape
    v = jax.random.normal(jax.random.PRNGKey(42), (in_f,), dtype=jnp.float32)
    v = v / (jnp.linalg.norm(v) + 1e-12)

    def body(_, v):
        u = w @ v
        u = u / (jnp.linalg.norm(u) + 1e-12)
        v = w.T @ u
        v = v / (jnp.linalg.norm(v) + 1e-12)
        return v

    v = lax.fori_loop(0, iters, body, v)
    return jnp.linalg.norm(w @ v)


def _maybe_pad(a, pads):
    if all(p == (0, 0) for p in pads):
        return a
    return jnp.pad(a, pads)


@functools.partial(jax.jit, static_argnames=("tm", "tn", "tk"))
def spectral_norm_linear(x, weight, bias, *, tm=None, tn=None, tk=None):
    """Forward of SpectralNorm(nn.Linear) — x:(B,IN), weight:(OUT,IN), bias:(OUT,)."""
    B, IN = x.shape
    OUT, IN_w = weight.shape
    assert IN == IN_w

    # ---- glue: top singular value via power iteration (not full SVD) ----
    w32 = weight.astype(jnp.float32)
    sigma = top_singular_value(w32)
    inv_sigma = (1.0 / jnp.maximum(sigma, 1e-12)).reshape(1).astype(jnp.float32)

    # ---- tile sizes (f32): lane-dense output, MXU-friendly, VMEM-safe ----
    if tm is None:
        tm = min(256, _round_up(B, 8))
    if tn is None:
        tn = min(256, _round_up(OUT, 128))
    if tk is None:
        tk = min(512, _round_up(IN, 128))

    Mp, Np, Kp = _round_up(B, tm), _round_up(OUT, tn), _round_up(IN, tk)

    # Zero-pad so every grid tile is full (skipped if already aligned).
    x_p = _maybe_pad(x.astype(jnp.float32), ((0, Mp - B), (0, Kp - IN)))
    w_p = _maybe_pad(w32, ((0, Np - OUT), (0, Kp - IN)))
    b_p = _maybe_pad(bias.astype(jnp.float32), ((0, Np - OUT),)).reshape(1, Np)

    grid = (Mp // tm, Np // tn, Kp // tk)   # reduction (K) axis last

    out_p = pl.pallas_call(
        spectral_linear_kernel,
        out_shape=jax.ShapeDtypeStruct((Mp, Np), x.dtype),
        grid_spec=pltpu.PrefetchScalarGridSpec(
            num_scalar_prefetch=1,          # inv_sigma -> SMEM scalar
            grid=grid,
            in_specs=[
                pl.BlockSpec((tm, tk), lambda i, j, k, s: (i, k)),   # x
                pl.BlockSpec((tn, tk), lambda i, j, k, s: (j, k)),   # weight
                pl.BlockSpec((1, tn), lambda i, j, k, s: (0, j)),    # bias
            ],
            out_specs=pl.BlockSpec((tm, tn), lambda i, j, k, s: (i, j)),
            scratch_shapes=[pltpu.VMEM((tm, tn), jnp.float32)],
        ),
        compiler_params=pltpu.CompilerParams(
            dimension_semantics=("parallel", "parallel", "arbitrary")),
    )(inv_sigma, x_p, w_p, b_p)

    return out_p[:B, :OUT], sigma


if __name__ == "__main__":
    # Deterministic parameter / input init (shapes from nn.Linear(IN, OUT)).
    B, IN, OUT = 8, 32, 16
    key = jax.random.PRNGKey(0)
    kx, kw, kb = jax.random.split(key, 3)

    x = jax.random.normal(kx, (B, IN), dtype=jnp.float32)
    weight = jax.random.normal(kw, (OUT, IN), dtype=jnp.float32) * 0.1
    bias = jax.random.normal(kb, (OUT,), dtype=jnp.float32) * 0.01

    out, sigma = spectral_norm_linear(x, weight, bias)
    out = jax.block_until_ready(out)

    # 1) Strict check of the kernel math (scale + matmul + bias) with the
    #    same sigma the kernel consumed.
    ref = x @ (weight / sigma).T + bias
    assert jnp.allclose(out, ref, atol=1e-5, rtol=1e-5), "kernel mismatch vs reference"

    # 2) Sanity check that power iteration matches the SVD top singular value
    #    (the original module's torch.svd semantics).
    sigma_svd = jnp.linalg.svd(weight, compute_uv=False)[0]
    assert jnp.allclose(sigma, sigma_svd, rtol=1e-3), "sigma mismatch vs SVD"

    print("KERNEL_OK")
</pallas_src>

<mosaic_0001>
module attributes {stable_mosaic.version = 11 : i64} {
  func.func @spectral_linear_kernel(%arg0: i32, %arg1: i32, %arg2: i32, %arg3: memref<1xf32, #tpu.memory_space<smem>>, %arg4: memref<8x128xf32, #tpu.memory_space<vmem>>, %arg5: memref<128x128xf32, #tpu.memory_space<vmem>>, %arg6: memref<1x128xf32, #tpu.memory_space<vmem>>, %arg7: memref<8x128xf32, #tpu.memory_space<vmem>>, %arg8: memref<8x128xf32, #tpu.memory_space<vmem>>) attributes {dimension_semantics = [#tpu.dimension_semantics<parallel>, #tpu.dimension_semantics<parallel>, #tpu.dimension_semantics<arbitrary>], iteration_bounds = array<i64: 1, 1, 1>, scalar_prefetch = 1 : i64, scratch_operands = 1 : i64, tpu.core_type = #tpu.core_type<tc>, window_params = [{transform_indices = @transform_0, window_bounds = array<i64: 8, 128>}, {transform_indices = @transform_1, window_bounds = array<i64: 128, 128>}, {transform_indices = @transform_2, window_bounds = array<i64: 1, 128>}, {transform_indices = @transform_3, window_bounds = array<i64: 8, 128>}]} {
    %c0_i32 = arith.constant 0 : i32
    %0 = arith.cmpi eq, %arg2, %c0_i32 : i32
    %1 = arith.extui %0 : i1 to i32
    %c0_i32_0 = arith.constant 0 : i32
    %2 = arith.cmpi ne, %1, %c0_i32_0 : i32
    scf.if %2 {
      %cst_10 = arith.constant 0.000000e+00 : f32
      %12 = vector.broadcast %cst_10 : f32 to vector<8x128xf32>
      %c0_11 = arith.constant 0 : index
      %c0_12 = arith.constant 0 : index
      %13 = vector.load %arg8[%c0_11, %c0_12] : memref<8x128xf32, #tpu.memory_space<vmem>>, vector<8x128xf32>
      tpu.vector_store %arg8[%c0_11, %c0_12], %12 {strides = array<i32>} : memref<8x128xf32, #tpu.memory_space<vmem>>, vector<8x128xf32>,
    } else {
    }
    %c0 = arith.constant 0 : index
    %c0_1 = arith.constant 0 : index
    %3 = vector.load %arg8[%c0, %c0_1] : memref<8x128xf32, #tpu.memory_space<vmem>>, vector<8x128xf32>
    %c0_2 = arith.constant 0 : index
    %c0_3 = arith.constant 0 : index
    %4 = vector.load %arg4[%c0_2, %c0_3] : memref<8x128xf32, #tpu.memory_space<vmem>>, vector<8x128xf32>
    %c0_4 = arith.constant 0 : index
    %c0_5 = arith.constant 0 : index
    %5 = vector.load %arg5[%c0_4, %c0_5] : memref<128x128xf32, #tpu.memory_space<vmem>>, vector<128x128xf32>
    %cst = arith.constant dense<0.000000e+00> : vector<8x128xf32>
    %6 = tpu.matmul %4, %5, %cst {dimension_numbers = #tpu.dot_dimension_numbers<[1], [1], [0], [0], [0, 0, 1, 0], [], []>} : vector<8x128xf32>, vector<128x128xf32>, vector<8x128xf32> -> vector<8x128xf32>
    %7 = arith.addf %3, %6 : vector<8x128xf32>
    %c0_6 = arith.constant 0 : index
    %c0_7 = arith.constant 0 : index
    %8 = vector.load %arg8[%c0_6, %c0_7] : memref<8x128xf32, #tpu.memory_space<vmem>>, vector<8x128xf32>
    tpu.vector_store %arg8[%c0_6, %c0_7], %7 {strides = array<i32>} : memref<8x128xf32, #tpu.memory_space<vmem>>, vector<8x128xf32>,
    %c0_i32_8 = arith.constant 0 : i32
    %9 = arith.cmpi eq, %arg2, %c0_i32_8 : i32
    %10 = arith.extui %9 : i1 to i32
    %c0_i32_9 = arith.constant 0 : i32
    %11 = arith.cmpi ne, %10, %c0_i32_9 : i32
    scf.if %11 {
      %c0_10 = arith.constant 0 : index
      %c0_11 = arith.constant 0 : index
      %12 = vector.load %arg8[%c0_10, %c0_11] : memref<8x128xf32, #tpu.memory_space<vmem>>, vector<8x128xf32>
      %c0_12 = arith.constant 0 : index
      %13 = memref.load %arg3[%c0_12] : memref<1xf32, #tpu.memory_space<smem>>
      %14 = vector.broadcast %13 : f32 to vector<8x128xf32>
      %15 = arith.mulf %12, %14 : vector<8x128xf32>
      %c0_13 = arith.constant 0 : index
      %c0_14 = arith.constant 0 : index
      %16 = vector.load %arg6[%c0_13, %c0_14] : memref<1x128xf32, #tpu.memory_space<vmem>>, vector<1x128xf32>
      %17 = vector.broadcast %16 : vector<1x128xf32> to vector<8x128xf32>
      %18 = arith.addf %15, %17 : vector<8x128xf32>
      %c0_15 = arith.constant 0 : index
      %c0_16 = arith.constant 0 : index
      %19 = vector.load %arg7[%c0_15, %c0_16] : memref<8x128xf32, #tpu.memory_space<vmem>>, vector<8x128xf32>
      tpu.vector_store %arg7[%c0_15, %c0_16], %18 {strides = array<i32>} : memref<8x128xf32, #tpu.memory_space<vmem>>, vector<8x128xf32>,
    } else {
    }
    return
  }
  func.func @transform_0(%arg0: i32, %arg1: i32, %arg2: i32, %arg3: memref<1xf32, #tpu.memory_space<smem>>) -> (i32, i32) {
    %c0_i32 = arith.constant 0 : i32
    return %arg0, %arg2 : i32, i32
  }
  func.func @transform_1(%arg0: i32, %arg1: i32, %arg2: i32, %arg3: memref<1xf32, #tpu.memory_space<smem>>) -> (i32, i32) {
    %c0_i32 = arith.constant 0 : i32
    return %arg1, %arg2 : i32, i32
  }
  func.func @transform_2(%arg0: i32, %arg1: i32, %arg2: i32, %arg3: memref<1xf32, #tpu.memory_space<smem>>) -> (i32, i32) {
    %c0_i32 = arith.constant 0 : i32
    %c0_i32_0 = arith.constant 0 : i32
    return %c0_i32, %arg1 : i32, i32
  }
  func.func @transform_3(%arg0: i32, %arg1: i32, %arg2: i32, %arg3: memref<1xf32, #tpu.memory_space<smem>>) -> (i32, i32) {
    %c0_i32 = arith.constant 0 : i32
    return %arg0, %arg1 : i32, i32
  }
}

</mosaic_0001>

<llo_original>
// kernel: spectral_norm_linear.1
$region0: #{spectral_norm_linear.1}
  #allocation0 [shape = 'u32[]', space=smem, size = 0x4, offset = 0x4, fixed_abs, tag = 'smem constant byte address 0x4 - core index']
  #allocation1 [shape = 'u32[144,128]{1,0:T(1,128)}', space=vmem, size = 0x12000, scoped, tag = 'internal scratch']
  #allocation2 [shape = 'f32[8,128]{1,0:T(8,128)}', space=vmem, size = 0x1000, scoped, tag = 'scratch operand']
  #allocation3 [shape = 's32[1]{0}', space=sflag, size = 0x4, scoped, tag = 'scoped memory for spectral_norm_linear.1']
  #allocation4 [shape = 'f32[1]{0:T(128)S(6)}', space=smem, size = 0x200, scoped, tag = 'prefetched SMEM operand 0']
  %s0 = inlined_call_operand.<no memory space> [shape: f32[1], index: 0, kind: input, shape index: {}]
  %s1 = inlined_call_operand.vmem [shape: f32[8,128], index: 1, kind: input, shape index: {}]
  %s2 = inlined_call_operand.vmem [shape: f32[128,128], index: 2, kind: input, shape index: {}]
  %s3 = inlined_call_operand.vmem [shape: f32[1,128], index: 3, kind: input, shape index: {}]
  %s4 = inlined_call_operand.hbm [shape: f32[8,128], index: 4, kind: output, shape index: {}]
  %s5 = sld [smem:[#allocation0]]
  $region30: #{spectral_norm_linear.1} parent=0
    _
  %s7 = ssub.s32 1, %s5
  %s8 = scalar_select 0, %s7, %s5
  %9 = sst [smem:[#allocation4]] %s0
  $region1: #{spectral_norm_linear.1} parent=0
    #allocation5 [shape = 'u8[4096]{0}', space=vmem, size = 0x1000, scoped, tag = 'output window, operand 0, single buffered']
    #allocation6 [shape = 's32[1]{0}', space=sflag, size = 0x4, scoped, tag = 'scoped memory for spectral_norm_linear.1']
    %10 = vsyncpa [#allocation6], 0
    // Predicated region
    $region2: #{spectral_norm_linear.1} parent=1 // pred_check
      _
    $region3: #{spectral_norm_linear.1} parent=1 // pred_check_branch
      %12 = sbr.rel (0) target = $region5
    $region4: #{spectral_norm_linear.1} parent=1 // pred_region
      _
    $region5: #{spectral_norm_linear.1} parent=1 // pred_fallthru
      _
    // Predicated region
    $region6: #{spectral_norm_linear.1} parent=1 // pred_check
      _
    $region7: #{spectral_norm_linear.1} parent=1 // pred_check_branch
      %14 = sbr.rel (0) target = $region9
    $region8: #{spectral_norm_linear.1} parent=1 // pred_region
      _
    $region9: #{spectral_norm_linear.1} parent=1 // pred_fallthru
      _
    // Predicated region
    $region10: #{spectral_norm_linear.1} parent=1 // pred_check
      _
    $region11: #{spectral_norm_linear.1} parent=1 // pred_check_branch
      %16 = sbr.rel (0) target = $region13
    $region12: #{spectral_norm_linear.1} parent=1 // pred_region
      _
    $region13: #{spectral_norm_linear.1} parent=1 // pred_fallthru
      _
    %p17 = scmp.eq.s32.totalorder 0, 0
    // Predicated region
    $region14: #{spectral_norm_linear.1} parent=1 // pred_check
      %p18 = pneg %p17
    $region15: #{spectral_norm_linear.1} parent=1 // pred_check_branch
      %20 = sbr.rel (%p18) target = $region17
    $region16: #{spectral_norm_linear.1} parent=1 // pred_region
      %21 = vst [vmem:[#allocation2] sm:$0xff] 0.0
    $region17: #{spectral_norm_linear.1} parent=1 // pred_fallthru
      _
    %v22 = vld [vmem:[#allocation2] sm:$0xff]
    %v23 = vld [vmem:[%s1] sm:$0xff]
    %v24 = vld [vmem:[%s2] sm:$0xff]
    %v25 = vld [vmem:[%s2 + $0x8] sm:$0xff]
    %v26 = vld [vmem:[%s2 + $0x10] sm:$0xff]
    %v27 = vld [vmem:[%s2 + $0x18] sm:$0xff]
    %v28 = vld [vmem:[%s2 + $0x20] sm:$0xff]
    %v29 = vld [vmem:[%s2 + $0x28] sm:$0xff]
    %v30 = vld [vmem:[%s2 + $0x30] sm:$0xff]
    %v31 = vld [vmem:[%s2 + $0x38] sm:$0xff]
    %v32 = vld [vmem:[%s2 + $0x40] sm:$0xff]
    %v33 = vld [vmem:[%s2 + $0x48] sm:$0xff]
    %v34 = vld [vmem:[%s2 + $0x50] sm:$0xff]
    %v35 = vld [vmem:[%s2 + $0x58] sm:$0xff]
    %v36 = vld [vmem:[%s2 + $0x60] sm:$0xff]
    %v37 = vld [vmem:[%s2 + $0x68] sm:$0xff]
    %v38 = vld [vmem:[%s2 + $0x70] sm:$0xff]
    %v39 = vld [vmem:[%s2 + $0x78] sm:$0xff]
    %40 = vmatprep.subr.mxu0 0.0
    %41 = vmatpush1.xpose.msra.mxu0 %v24
    %42 = vmatprep.subr.mxu0 0.0
    %43 = vmatpush1.xpose.msra.mxu0 %v25
    %44 = vmatprep.subr.mxu0 0.0
    %45 = vmatpush1.xpose.msra.mxu0 %v26
    %46 = vmatprep.subr.mxu0 0.0
    %47 = vmatpush1.xpose.msra.mxu0 %v27
    %48 = vmatprep.subr.mxu0 0.0
    %49 = vmatpush1.xpose.msra.mxu0 %v28
    %50 = vmatprep.subr.mxu0 0.0
    %51 = vmatpush1.xpose.msra.mxu0 %v29
    %52 = vmatprep.subr.mxu0 0.0
    %53 = vmatpush1.xpose.msra.mxu0 %v30
    %54 = vmatprep.subr.mxu0 0.0
    %55 = vmatpush1.xpose.msra.mxu0 %v31
    %56 = vmatprep.subr.mxu0 0.0
    %57 = vmatpush1.xpose.msra.mxu0 %v32
    %58 = vmatprep.subr.mxu0 0.0
    %59 = vmatpush1.xpose.msra.mxu0 %v33
    %60 = vmatprep.subr.mxu0 0.0
    %61 = vmatpush1.xpose.msra.mxu0 %v34
    %62 = vmatprep.subr.mxu0 0.0
    %63 = vmatpush1.xpose.msra.mxu0 %v35
    %64 = vmatprep.subr.mxu0 0.0
    %65 = vmatpush1.xpose.msra.mxu0 %v36
    %66 = vmatprep.subr.mxu0 0.0
    %67 = vmatpush1.xpose.msra.mxu0 %v37
    %68 = vmatprep.subr.mxu0 0.0
    %69 = vmatpush1.xpose.msra.mxu0 %v38
    %70 = vmatprep.subr.mxu0 0.0
    %71 = vmatpush1.xpose.msra.mxu0 %v39
    %72 = vmatprep.subr.mxu0 0.0
    %73 = vmatpush1.xpose.msra.mxu0 0.0
    %74 = vmatprep.subr.mxu0 0.0
    %75 = vmatpush1.xpose.msra.mxu0 0.0
    %76 = vmatprep.subr.mxu0 0.0
    %77 = vmatpush1.xpose.msra.mxu0 0.0
    %78 = vmatprep.subr.mxu0 0.0
    %79 = vmatpush1.xpose.msra.mxu0 0.0
    %80 = vmatprep.subr.mxu0 0.0
    %81 = vmatpush1.xpose.msra.mxu0 0.0
    %82 = vmatprep.subr.mxu0 0.0
    %83 = vmatpush1.xpose.msra.mxu0 0.0
    %84 = vmatprep.subr.mxu0 0.0
    %85 = vmatpush1.xpose.msra.mxu0 0.0
    %86 = vmatprep.subr.mxu0 0.0
    %87 = vmatpush1.xpose.msra.mxu0 0.0
    %88 = vmatprep.subr.mxu0 0.0
    %89 = vmatpush1.xpose.msra.mxu0 0.0
    %90 = vmatprep.subr.mxu0 0.0
    %91 = vmatpush1.xpose.msra.mxu0 0.0
    %92 = vmatprep.subr.mxu0 0.0
    %93 = vmatpush1.xpose.msra.mxu0 0.0
    %94 = vmatprep.subr.mxu0 0.0
    %95 = vmatpush1.xpose.msra.mxu0 0.0
    %96 = vmatprep.subr.mxu0 0.0
    %97 = vmatpush1.xpose.msra.mxu0 0.0
    %98 = vmatprep.subr.mxu0 0.0
    %99 = vmatpush1.xpose.msra.mxu0 0.0
    %100 = vmatprep.subr.mxu0 0.0
    %101 = vmatpush1.xpose.msra.mxu0 0.0
    %102 = vmatprep.subr.mxu0 0.0
    %103 = vmatpush1.xpose.msra.mxu0 0.0
    %104 = vmatprep.mubr.f32.mxu0 0.0
    %105 = vmatmul.mubr.f32.gmra.mrb[0].mxu0 %v23
    %v106 = vpop.f32.mrb[0].mxu0
    %v107 = vadd.f32 0.0, %v106
    %v108 = vpop.f32.mrb[0].mxu0
    %109 = vdwg.mxu0
    %v110 = vadd.f32 %v22, %v107
    %111 = vst [vmem:[#allocation2] sm:$0xff] %v110
    // Predicated region
    $region18: #{spectral_norm_linear.1} parent=1 // pred_check
      %p112 = pneg %p17
    $region19: #{spectral_norm_linear.1} parent=1 // pred_check_branch
      %114 = sbr.rel (%p112) target = $region21
    $region20: #{spectral_norm_linear.1} parent=1 // pred_region
      %v115 = vld [vmem:[#allocation2] sm:$0xff]
      %s116 = sld [smem:[#allocation4]]
      %v117 = vstv %s116
      %v118 = vmul.f32 %v115, %v117
      %v119 = vld [vmem:[%s3] sm:$0x1]
      %v121 = vlaneseq
      %v122 = vshrl.u32 %v121, 7
      %v123 = vsub.s32 0, %v122
      %v124 = vrot.slane %v119, %v123
      %v126 = vadd.f32 %v118, %v124
      %127 = vst [vmem:[#allocation5] sm:$0xff] %v126
    $region21: #{spectral_norm_linear.1} parent=1 // pred_fallthru
      _
    // Predicated region
    $region22: #{spectral_norm_linear.1} parent=1 // pred_check
      _
    $region23: #{spectral_norm_linear.1} parent=1 // pred_check_branch
      %129 = sbr.rel (0) target = $region25
    $region24: #{spectral_norm_linear.1} parent=1 // pred_region
      %s131 = ssub.s32 128, 128
      %132 = vsyncadd [#allocation6], %s131
      %s134 = sshll.u32 [#allocation5], 4
      %s135 = int_to_ptr.vmem [resolvable:$true] %s134
      %137 = dma.vmem_to_hbm [thread:$0]  %s135, 128, %s4, [#allocation6]
    $region25: #{spectral_norm_linear.1} parent=1 // pred_fallthru
      _
    // Predicated region
    $region26: #{spectral_norm_linear.1} parent=1 // pred_check
      _
    $region27: #{spectral_norm_linear.1} parent=1 // pred_check_branch
      %139 = sbr.rel (0) target = $region29
    $region28: #{spectral_norm_linear.1} parent=1 // pred_region
      %140 = dma.done [#allocation6], 128
    $region29: #{spectral_norm_linear.1} parent=1 // pred_fallthru
      _
    %141 = vsyncpa [#allocation6], 1

</llo_original>
